<compile_context>
chip_gen: v5e
topology: v5e:2x2
jax: 0.10.0
libtpu: 0.0.40
codegen_flags: <defaults>
</compile_context>

<pallas_src>
import jax
import jax.numpy as jnp
from jax.experimental import pallas as pl
from jax.experimental.pallas import tpu as pltpu


def _round_up(v, m):
    return ((v + m - 1) // m) * m


def dnn1_kernel(x_ref, wf_ref, b1_ref, wh_ref, bh_ref, out_ref, acc_ref):
    s = pl.program_id(1)

    # ---- Global average pool: pipelined spatial partial sums (f32 accumulate).
    @pl.when(s == 0)
    def _():
        acc_ref[...] = jnp.zeros_like(acc_ref)

    acc_ref[...] += jnp.sum(x_ref[...].astype(jnp.float32), axis=-1)

    # ---- Finalize on the last spatial step: fused (GAP/HW)@backbone@fc1 + ReLU,
    #      then the fused per-label heads matmul into a 128-lane-padded block.
    @pl.when(s == pl.num_programs(1) - 1)
    def _():
        # 1/(H*W) and the linear backbone stand-in are already folded into wf_ref.
        h = jnp.dot(acc_ref[...].astype(jnp.bfloat16), wf_ref[...],
                    preferred_element_type=jnp.float32) + b1_ref[...]
        h = jnp.maximum(h, 0.0)
        # nn.Dropout(0.2) -> identity in eval/inference mode.
        out_ref[...] = (jnp.dot(h.astype(jnp.bfloat16), wh_ref[...],
                                preferred_element_type=jnp.float32)
                        + bh_ref[...])


def _prepare_params(params, label_sizes, hw):
    """Fold backbone-proj + 1/(H*W) + fc1 into one bf16 matrix; pad heads to 128 lanes."""
    total = sum(label_sizes.values())
    npad = _round_up(total, 128)
    nmid = params["fc1_w"].shape[1]
    # TODO(synk): the frozen ResNet conv stack is loaded from a .pt checkpoint in
    # the original module and has no reproducible architecture here; a frozen
    # linear projection C -> in_features stands in for it (the fusion below is
    # only valid while that stand-in stays linear).
    w_fused = ((params["backbone_w"] @ params["fc1_w"]) / float(hw)).astype(jnp.bfloat16)
    b1 = params["fc1_b"].astype(jnp.float32)
    wh = (jnp.zeros((nmid, npad), jnp.float32)
          .at[:, :total].set(params["heads_w"]).astype(jnp.bfloat16))
    bh = jnp.zeros((1, npad), jnp.float32).at[:, :total].set(params["heads_b"])
    return w_fused, b1, wh, bh, total, npad


def _split_heads(out, label_sizes):
    y = {}
    start = 0
    for label, n in label_sizes.items():
        y[label] = out[:, start:start + n]
        start += n
    return y


def dnn1_forward(x, params, label_sizes):
    """x: (B, C, H, W) float32 NCHW image batch. Returns dict label -> logits."""
    B, C, H, W = x.shape
    hw = H * W
    wf, b1, wh, bh, total, npad = _prepare_params(params, label_sizes, hw)
    nmid = wf.shape[1]

    # --- tiling -----------------------------------------------------------
    tb = 128 if B >= 128 else max(8, _round_up(B, 8))     # batch tile (MXU rows / sublanes)
    bp = _round_up(B, tb)
    ts = 2048 if hw >= 2048 else _round_up(hw, 128)       # spatial tile (lanes), <=~1.5 MiB/blk
    hwp = _round_up(hw, ts)

    x3 = x.reshape(B, C, hw).astype(jnp.bfloat16)
    if bp > B or hwp > hw:
        # Zero padding: spatial sum unchanged; padded batch rows are sliced off.
        x3 = jnp.pad(x3, ((0, bp - B), (0, 0), (0, hwp - hw)))

    grid = (bp // tb, hwp // ts)

    out = pl.pallas_call(
        dnn1_kernel,
        out_shape=jax.ShapeDtypeStruct((bp, npad), jnp.float32),
        grid_spec=pltpu.PrefetchScalarGridSpec(
            num_scalar_prefetch=0,
            grid=grid,
            in_specs=[
                pl.BlockSpec((tb, C, ts), lambda i, s: (i, 0, s)),   # x block (pipelined DMA)
                pl.BlockSpec((C, nmid), lambda i, s: (0, 0)),        # fused weight, resident
                pl.BlockSpec((1, nmid), lambda i, s: (0, 0)),        # fc1 bias, resident
                pl.BlockSpec((nmid, npad), lambda i, s: (0, 0)),     # fused heads, resident
                pl.BlockSpec((1, npad), lambda i, s: (0, 0)),        # heads bias, resident
            ],
            out_specs=pl.BlockSpec((tb, npad), lambda i, s: (i, 0)),
            scratch_shapes=[pltpu.VMEM((tb, C), jnp.float32)],       # GAP accumulator
        ),
        compiler_params=pltpu.CompilerParams(
            dimension_semantics=("parallel", "arbitrary"),
            vmem_limit_bytes=32 * 1024 * 1024,
        ),
    )(x3, wf, b1, wh, bh)

    return _split_heads(out[:B, :total], label_sizes)


def dnn1_reference(x, params, label_sizes):
    """Pure-JAX reference using the identical fused / bf16-cast parameters."""
    B, C, H, W = x.shape
    hw = H * W
    wf, b1, wh, bh, total, _ = _prepare_params(params, label_sizes, hw)
    gap_sum = jnp.sum(x.reshape(B, C, hw).astype(jnp.bfloat16).astype(jnp.float32), axis=-1)
    h = jnp.dot(gap_sum.astype(jnp.bfloat16), wf, preferred_element_type=jnp.float32) + b1
    h = jnp.maximum(h, 0.0)
    out = jnp.dot(h.astype(jnp.bfloat16), wh, preferred_element_type=jnp.float32) + bh
    return _split_heads(out[:, :total], label_sizes)


def init_params(key, C, in_features, nmid_ft, label_sizes):
    total_classes = sum(label_sizes.values())
    k = jax.random.split(key, 5)
    return {
        "backbone_w": jax.random.normal(k[0], (C, in_features), jnp.float32) * 0.1,
        "fc1_w": jax.random.normal(k[1], (in_features, nmid_ft), jnp.float32)
                 * (1.0 / jnp.sqrt(in_features)),
        "fc1_b": jax.random.normal(k[2], (1, nmid_ft), jnp.float32) * 0.01,
        "heads_w": jax.random.normal(k[3], (nmid_ft, total_classes), jnp.float32)
                   * (1.0 / jnp.sqrt(nmid_ft)),
        "heads_b": jax.random.normal(k[4], (1, total_classes), jnp.float32) * 0.01,
    }


if __name__ == "__main__":
    key = jax.random.PRNGKey(0)
    k_x, k_p = jax.random.split(key)

    # Small shapes consistent with the module's forward pass.
    B, C, H, W = 2, 4, 16, 16
    in_features = 128        # stand-in for resnet.fc.in_features
    nmid_ft = 512            # as in the module (self.nmid_ft = 512)
    label_sizes = {"gender": 2, "age": 5, "ethnicity": 7}  # nclasses per label

    x = jax.random.normal(k_x, (B, C, H, W), jnp.float32)
    params = init_params(k_p, C, in_features, nmid_ft, label_sizes)

    y = dnn1_forward(x, params, label_sizes)
    jax.tree_util.tree_map(jax.block_until_ready, y)

    y_ref = dnn1_reference(x, params, label_sizes)
    for label, n in label_sizes.items():
        assert y[label].shape == (B, n), (label, y[label].shape)
        assert jnp.allclose(y[label], y_ref[label], rtol=1e-2, atol=1e-3), label

    print("KERNEL_OK")
</pallas_src>

<mosaic_0001>
module attributes {stable_mosaic.version = 11 : i64} {
  func.func @dnn1_kernel(%arg0: i32, %arg1: i32, %arg2: memref<8x4x256xbf16, #tpu.memory_space<vmem>>, %arg3: memref<4x512xbf16, #tpu.memory_space<vmem>>, %arg4: memref<1x512xf32, #tpu.memory_space<vmem>>, %arg5: memref<512x128xbf16, #tpu.memory_space<vmem>>, %arg6: memref<1x128xf32, #tpu.memory_space<vmem>>, %arg7: memref<8x128xf32, #tpu.memory_space<vmem>>, %arg8: memref<8x4xf32, #tpu.memory_space<vmem>>) attributes {dimension_semantics = [#tpu.dimension_semantics<parallel>, #tpu.dimension_semantics<arbitrary>], iteration_bounds = array<i64: 1, 1>, scalar_prefetch = 0 : i64, scratch_operands = 1 : i64, tpu.core_type = #tpu.core_type<tc>, window_params = [{transform_indices = @transform_0, window_bounds = array<i64: 8, 4, 256>}, {pipeline_mode = #tpu.pipeline_mode<synchronous>, transform_indices = @transform_1, window_bounds = array<i64: 4, 512>}, {pipeline_mode = #tpu.pipeline_mode<synchronous>, transform_indices = @transform_2, window_bounds = array<i64: 1, 512>}, {pipeline_mode = #tpu.pipeline_mode<synchronous>, transform_indices = @transform_3, window_bounds = array<i64: 512, 128>}, {pipeline_mode = #tpu.pipeline_mode<synchronous>, transform_indices = @transform_4, window_bounds = array<i64: 1, 128>}, {transform_indices = @transform_5, window_bounds = array<i64: 8, 128>}]} {
    %c0_i32 = arith.constant 0 : i32
    %0 = arith.cmpi eq, %arg1, %c0_i32 : i32
    %1 = arith.extui %0 : i1 to i32
    %c0_i32_0 = arith.constant 0 : i32
    %2 = arith.cmpi ne, %1, %c0_i32_0 : i32
    scf.if %2 {
      %cst_9 = arith.constant 0.000000e+00 : f32
      %12 = vector.broadcast %cst_9 : f32 to vector<8x4xf32>
      %c0_10 = arith.constant 0 : index
      %c0_11 = arith.constant 0 : index
      %13 = vector.load %arg8[%c0_10, %c0_11] : memref<8x4xf32, #tpu.memory_space<vmem>>, vector<8x4xf32>
      tpu.vector_store %arg8[%c0_10, %c0_11], %12 {strides = array<i32>} : memref<8x4xf32, #tpu.memory_space<vmem>>, vector<8x4xf32>,
    } else {
    }
    %c0 = arith.constant 0 : index
    %c0_1 = arith.constant 0 : index
    %3 = vector.load %arg8[%c0, %c0_1] : memref<8x4xf32, #tpu.memory_space<vmem>>, vector<8x4xf32>
    %c0_2 = arith.constant 0 : index
    %c0_3 = arith.constant 0 : index
    %c0_4 = arith.constant 0 : index
    %4 = vector.load %arg2[%c0_2, %c0_3, %c0_4] : memref<8x4x256xbf16, #tpu.memory_space<vmem>>, vector<8x4x256xbf16>
    %5 = arith.extf %4 : vector<8x4x256xbf16> to vector<8x4x256xf32>
    %cst = arith.constant dense<0.000000e+00> : vector<8x4xf32>
    %6 = vector.multi_reduction <add>, %5, %cst [2] : vector<8x4x256xf32> to vector<8x4xf32>
    %7 = arith.addf %3, %6 : vector<8x4xf32>
    %c0_5 = arith.constant 0 : index
    %c0_6 = arith.constant 0 : index
    %8 = vector.load %arg8[%c0_5, %c0_6] : memref<8x4xf32, #tpu.memory_space<vmem>>, vector<8x4xf32>
    tpu.vector_store %arg8[%c0_5, %c0_6], %7 {strides = array<i32>} : memref<8x4xf32, #tpu.memory_space<vmem>>, vector<8x4xf32>,
    %c0_i32_7 = arith.constant 0 : i32
    %9 = arith.cmpi eq, %arg1, %c0_i32_7 : i32
    %10 = arith.extui %9 : i1 to i32
    %c0_i32_8 = arith.constant 0 : i32
    %11 = arith.cmpi ne, %10, %c0_i32_8 : i32
    scf.if %11 {
      %c0_9 = arith.constant 0 : index
      %c0_10 = arith.constant 0 : index
      %12 = vector.load %arg8[%c0_9, %c0_10] : memref<8x4xf32, #tpu.memory_space<vmem>>, vector<8x4xf32>
      %13 = arith.truncf %12 : vector<8x4xf32> to vector<8x4xbf16>
      %c0_11 = arith.constant 0 : index
      %c0_12 = arith.constant 0 : index
      %14 = vector.load %arg3[%c0_11, %c0_12] : memref<4x512xbf16, #tpu.memory_space<vmem>>, vector<4x512xbf16>
      %cst_13 = arith.constant dense<0.000000e+00> : vector<8x512xf32>
      %15 = tpu.matmul %13, %14, %cst_13 {dimension_numbers = #tpu.dot_dimension_numbers<[1], [0], [0], [1], [0, 0, 1, 1], [], []>} : vector<8x4xbf16>, vector<4x512xbf16>, vector<8x512xf32> -> vector<8x512xf32>
      %c0_14 = arith.constant 0 : index
      %c0_15 = arith.constant 0 : index
      %16 = vector.load %arg4[%c0_14, %c0_15] : memref<1x512xf32, #tpu.memory_space<vmem>>, vector<1x512xf32>
      %17 = vector.broadcast %16 : vector<1x512xf32> to vector<8x512xf32>
      %18 = arith.addf %15, %17 : vector<8x512xf32>
      %cst_16 = arith.constant 0.000000e+00 : f32
      %19 = vector.broadcast %cst_16 : f32 to vector<8x512xf32>
      %20 = arith.maximumf %18, %19 : vector<8x512xf32>
      %21 = arith.truncf %20 : vector<8x512xf32> to vector<8x512xbf16>
      %c0_17 = arith.constant 0 : index
      %c0_18 = arith.constant 0 : index
      %22 = vector.load %arg5[%c0_17, %c0_18] : memref<512x128xbf16, #tpu.memory_space<vmem>>, vector<512x128xbf16>
      %cst_19 = arith.constant dense<0.000000e+00> : vector<8x128xf32>
      %23 = tpu.matmul %21, %22, %cst_19 {dimension_numbers = #tpu.dot_dimension_numbers<[1], [0], [0], [1], [0, 0, 1, 1], [], []>} : vector<8x512xbf16>, vector<512x128xbf16>, vector<8x128xf32> -> vector<8x128xf32>
      %c0_20 = arith.constant 0 : index
      %c0_21 = arith.constant 0 : index
      %24 = vector.load %arg6[%c0_20, %c0_21] : memref<1x128xf32, #tpu.memory_space<vmem>>, vector<1x128xf32>
      %25 = vector.broadcast %24 : vector<1x128xf32> to vector<8x128xf32>
      %26 = arith.addf %23, %25 : vector<8x128xf32>
      %c0_22 = arith.constant 0 : index
      %c0_23 = arith.constant 0 : index
      %27 = vector.load %arg7[%c0_22, %c0_23] : memref<8x128xf32, #tpu.memory_space<vmem>>, vector<8x128xf32>
      tpu.vector_store %arg7[%c0_22, %c0_23], %26 {strides = array<i32>} : memref<8x128xf32, #tpu.memory_space<vmem>>, vector<8x128xf32>,
    } else {
    }
    return
  }
  func.func @transform_0(%arg0: i32, %arg1: i32) -> (i32, i32, i32) {
    %c0_i32 = arith.constant 0 : i32
    %c0_i32_0 = arith.constant 0 : i32
    return %arg0, %c0_i32, %arg1 : i32, i32, i32
  }
  func.func @transform_1(%arg0: i32, %arg1: i32) -> (i32, i32) {
    %c0_i32 = arith.constant 0 : i32
    %c0_i32_0 = arith.constant 0 : i32
    %c0_i32_1 = arith.constant 0 : i32
    return %c0_i32, %c0_i32_0 : i32, i32
  }
  func.func @transform_2(%arg0: i32, %arg1: i32) -> (i32, i32) {
    %c0_i32 = arith.constant 0 : i32
    %c0_i32_0 = arith.constant 0 : i32
    %c0_i32_1 = arith.constant 0 : i32
    return %c0_i32, %c0_i32_0 : i32, i32
  }
  func.func @transform_3(%arg0: i32, %arg1: i32) -> (i32, i32) {
    %c0_i32 = arith.constant 0 : i32
    %c0_i32_0 = arith.constant 0 : i32
    %c0_i32_1 = arith.constant 0 : i32
    return %c0_i32, %c0_i32_0 : i32, i32
  }
  func.func @transform_4(%arg0: i32, %arg1: i32) -> (i32, i32) {
    %c0_i32 = arith.constant 0 : i32
    %c0_i32_0 = arith.constant 0 : i32
    %c0_i32_1 = arith.constant 0 : i32
    return %c0_i32, %c0_i32_0 : i32, i32
  }
  func.func @transform_5(%arg0: i32, %arg1: i32) -> (i32, i32) {
    %c0_i32 = arith.constant 0 : i32
    %c0_i32_0 = arith.constant 0 : i32
    return %arg0, %c0_i32 : i32, i32
  }
}

</mosaic_0001>

<llo_original>
// kernel: tpu_custom_call.1
$region0: #{tpu_custom_call.1}
  #allocation0 [shape = 'u32[]', space=smem, size = 0x4, offset = 0x4, fixed_abs, tag = 'smem constant byte address 0x4 - core index']
  #allocation1 [shape = 'u32[72,128]{1,0:T(1,128)}', space=vmem, size = 0x9000, scoped, tag = 'internal scratch']
  #allocation2 [shape = 'f32[8,4]{1,0:T(8,128)}', space=vmem, size = 0x1000, scoped, tag = 'scratch operand']
  %s0 = inlined_call_operand.hbm [shape: bf16[8,4,256], index: 0, kind: input, shape index: {}]
  %s1 = inlined_call_operand.hbm [shape: bf16[4,512], index: 1, kind: input, shape index: {}]
  %s2 = inlined_call_operand.hbm [shape: f32[1,512], index: 2, kind: input, shape index: {}]
  %s3 = inlined_call_operand.hbm [shape: bf16[512,128], index: 3, kind: input, shape index: {}]
  %s4 = inlined_call_operand.vmem [shape: f32[1,128], index: 4, kind: input, shape index: {}]
  %s5 = inlined_call_operand.hbm [shape: f32[8,128], index: 5, kind: output, shape index: {}]
  %s6 = sld [smem:[#allocation0]]
  $region54: #{tpu_custom_call.1} parent=0
    _
  %s8 = ssub.s32 1, %s6
  %s9 = scalar_select 0, %s8, %s6
  $region1: #{tpu_custom_call.1} parent=0
    #allocation3 [shape = 'u8[16384]{0}', space=vmem, size = 0x4000, scoped, tag = 'input window, operand 0, single buffered']
    #allocation4 [shape = 's32[1]{0}', space=sflag, size = 0x4, scoped, tag = 'scoped memory for tpu_custom_call.1']
    #allocation5 [shape = 's32[1]{0}', space=sflag, size = 0x4, scoped, tag = 'scoped memory for tpu_custom_call.1']
    #allocation6 [shape = 'u8[4096]{0}', space=vmem, size = 0x1000, scoped, tag = 'input window, operand 1, single buffered']
    #allocation7 [shape = 's32[1]{0}', space=sflag, size = 0x4, scoped, tag = 'scoped memory for tpu_custom_call.1']
    #allocation8 [shape = 'u8[2048]{0}', space=vmem, size = 0x800, scoped, tag = 'input window, operand 2, single buffered']
    #allocation9 [shape = 'u8[131072]{0}', space=vmem, size = 0x20000, scoped, tag = 'input window, operand 3, single buffered']
    #allocation10 [shape = 's32[1]{0}', space=sflag, size = 0x4, scoped, tag = 'scoped memory for tpu_custom_call.1']
    #allocation11 [shape = 'u8[4096]{0}', space=vmem, size = 0x1000, scoped, tag = 'output window, operand 0, single buffered']
    %10 = vsyncpa [#allocation4], 0
    %11 = vsyncpa [#allocation7], 0
    %12 = vsyncpa [#allocation10], 0
    %13 = vsyncpa [#allocation5], 0
    // Predicated region
    $region2: #{tpu_custom_call.1} parent=1 // pred_check
      _
    $region3: #{tpu_custom_call.1} parent=1 // pred_check_branch
      %15 = sbr.rel (0) target = $region5
    $region4: #{tpu_custom_call.1} parent=1 // pred_region
      %17 = vsyncadd [#allocation4], 0
      %s18 = sshll.u32 %s0, 4
      %s19 = int_to_ptr.hbm [resolvable:$true] %s18
      %s20 = sshll.u32 [#allocation3], 4
      %s21 = int_to_ptr.vmem [resolvable:$true] %s20
      %26 = dma.hbm_to_vmem [thread:$0]  %s19, 512, %s21, [#allocation4], 64, 64, 4
    $region5: #{tpu_custom_call.1} parent=1 // pred_fallthru
      _
    // Predicated region
    $region6: #{tpu_custom_call.1} parent=1 // pred_check
      _
    $region7: #{tpu_custom_call.1} parent=1 // pred_check_branch
      %28 = sbr.rel (0) target = $region9
    $region8: #{tpu_custom_call.1} parent=1 // pred_region
      %30 = vsyncadd [#allocation7], 0
      %s32 = sshll.u32 %s1, 4
      %s33 = int_to_ptr.hbm [resolvable:$true] %s32
      %s34 = sshll.u32 [#allocation6], 4
      %s35 = int_to_ptr.vmem [resolvable:$true] %s34
      %37 = dma.hbm_to_vmem [thread:$0]  %s33, 128, %s35, [#allocation7]
    $region9: #{tpu_custom_call.1} parent=1 // pred_fallthru
      _
    // Predicated region
    $region10: #{tpu_custom_call.1} parent=1 // pred_check
      _
    $region11: #{tpu_custom_call.1} parent=1 // pred_check_branch
      %39 = sbr.rel (0) target = $region13
    $region12: #{tpu_custom_call.1} parent=1 // pred_region
      %41 = vsyncadd [#allocation7], 0
      %s43 = sshll.u32 %s2, 4
      %s44 = int_to_ptr.hbm [resolvable:$true] %s43
      %s45 = sshll.u32 [#allocation8], 4
      %s46 = int_to_ptr.vmem [resolvable:$true] %s45
      %48 = dma.hbm_to_vmem [thread:$0]  %s44, 64, %s46, [#allocation7]
    $region13: #{tpu_custom_call.1} parent=1 // pred_fallthru
      _
    // Predicated region
    $region14: #{tpu_custom_call.1} parent=1 // pred_check
      _
    $region15: #{tpu_custom_call.1} parent=1 // pred_check_branch
      %50 = sbr.rel (0) target = $region17
    $region16: #{tpu_custom_call.1} parent=1 // pred_region
      %52 = vsyncadd [#allocation10], 0
      %s53 = sshll.u32 %s3, 4
      %s54 = int_to_ptr.hbm [resolvable:$true] %s53
      %s55 = sshll.u32 [#allocation9], 4
      %s56 = int_to_ptr.vmem [resolvable:$true] %s55
      %61 = dma.hbm_to_vmem [thread:$0]  %s54, 4096, %s56, [#allocation10], 64, 64, 4
    $region17: #{tpu_custom_call.1} parent=1 // pred_fallthru
      _
    // Predicated region
    $region18: #{tpu_custom_call.1} parent=1 // pred_check
      _
    $region19: #{tpu_custom_call.1} parent=1 // pred_check_branch
      %63 = sbr.rel (0) target = $region21
    $region20: #{tpu_custom_call.1} parent=1 // pred_region
      _
    $region21: #{tpu_custom_call.1} parent=1 // pred_fallthru
      _
    // Predicated region
    $region22: #{tpu_custom_call.1} parent=1 // pred_check
      _
    $region23: #{tpu_custom_call.1} parent=1 // pred_check_branch
      %65 = sbr.rel (0) target = $region25
    $region24: #{tpu_custom_call.1} parent=1 // pred_region
      %67 = dma.done [#allocation4], 512
    $region25: #{tpu_custom_call.1} parent=1 // pred_fallthru
      _
    // Predicated region
    $region26: #{tpu_custom_call.1} parent=1 // pred_check
      _
    $region27: #{tpu_custom_call.1} parent=1 // pred_check_branch
      %69 = sbr.rel (0) target = $region29
    $region28: #{tpu_custom_call.1} parent=1 // pred_region
      %71 = dma.done [#allocation7], 128
    $region29: #{tpu_custom_call.1} parent=1 // pred_fallthru
      _
    // Predicated region
    $region30: #{tpu_custom_call.1} parent=1 // pred_check
      _
    $region31: #{tpu_custom_call.1} parent=1 // pred_check_branch
      %73 = sbr.rel (0) target = $region33
    $region32: #{tpu_custom_call.1} parent=1 // pred_region
      %75 = dma.done [#allocation7], 64
    $region33: #{tpu_custom_call.1} parent=1 // pred_fallthru
      _
    // Predicated region
    $region34: #{tpu_custom_call.1} parent=1 // pred_check
      _
    $region35: #{tpu_custom_call.1} parent=1 // pred_check_branch
      %77 = sbr.rel (0) target = $region37
    $region36: #{tpu_custom_call.1} parent=1 // pred_region
      %79 = dma.done [#allocation10], 4096
    $region37: #{tpu_custom_call.1} parent=1 // pred_fallthru
      _
    %p81 = scmp.eq.s32.totalorder 0, 0
    // Predicated region
    $region38: #{tpu_custom_call.1} parent=1 // pred_check
      %p82 = pneg %p81
    $region39: #{tpu_custom_call.1} parent=1 // pred_check_branch
      %84 = sbr.rel (%p82) target = $region41
    $region40: #{tpu_custom_call.1} parent=1 // pred_region
      %vm85 = vcmask 31744
      %86 = vst.msk [vmem:[#allocation2] sm:$0xff] %vm85, 0.0
    $region41: #{tpu_custom_call.1} parent=1 // pred_fallthru
      _
    %v87 = vld [vmem:[#allocation2] sm:$0xff]
    %v88 = vld [vmem:[#allocation3] sm:$0xf]
    %v89 = vld [vmem:[#allocation3 + $0x4] sm:$0xf]
    %v90 = vld [vmem:[#allocation3 + $0x8] sm:$0xf]
    %v91 = vld [vmem:[#allocation3 + $0xc] sm:$0xf]
    %v92 = vld [vmem:[#allocation3 + $0x10] sm:$0xf]
    %v93 = vld [vmem:[#allocation3 + $0x14] sm:$0xf]
    %v94 = vld [vmem:[#allocation3 + $0x18] sm:$0xf]
    %v95 = vld [vmem:[#allocation3 + $0x1c] sm:$0xf]
    %v96 = vunpack.c.l.bf16 %v88
    %v97 = vunpack.c.l.bf16 %v89
    %v98 = vunpack.c.l.bf16 %v90
    %v99 = vunpack.c.l.bf16 %v91
    %v100 = vunpack.c.l.bf16 %v92
    %v101 = vunpack.c.l.bf16 %v93
    %v102 = vunpack.c.l.bf16 %v94
    %v103 = vunpack.c.l.bf16 %v95
    %112 = vst [vmem:[#allocation1] ss:$2 sm:$0xff] %v96
    %v113 = vld.sshfl [vmem:[#allocation1] sm:$0xff pattern:$0x75316420]
    %v114 = vld.sshfl [vmem:[#allocation1 + $0x8] sm:$0xff pattern:$0x75316420]
    %s115 = scalar_lea.vmem [#allocation1], 16
    %116 = vst [vmem:[%s115] ss:$2 sm:$0xff] %v97
    %v117 = vld.sshfl [vmem:[#allocation1 + $0x10] sm:$0xff pattern:$0x75316420]
    %v118 = vld.sshfl [vmem:[#allocation1 + $0x18] sm:$0xff pattern:$0x75316420]
    %s119 = scalar_lea.vmem [#allocation1], 32
    %120 = vst [vmem:[%s119] ss:$2 sm:$0xff] %v98
    %v121 = vld.sshfl [vmem:[#allocation1 + $0x20] sm:$0xff pattern:$0x75316420]
    %v122 = vld.sshfl [vmem:[#allocation1 + $0x28] sm:$0xff pattern:$0x75316420]
    %s123 = scalar_lea.vmem [#allocation1], 48
    %124 = vst [vmem:[%s123] ss:$2 sm:$0xff] %v99
    %v125 = vld.sshfl [vmem:[#allocation1 + $0x30] sm:$0xff pattern:$0x75316420]
    %v126 = vld.sshfl [vmem:[#allocation1 + $0x38] sm:$0xff pattern:$0x75316420]
    %127 = vst [vmem:[#allocation1] ss:$2 sm:$0xff] %v100
    %v128 = vld.sshfl [vmem:[#allocation1] sm:$0xff pattern:$0x75316420]
    %v129 = vld.sshfl [vmem:[#allocation1 + $0x8] sm:$0xff pattern:$0x75316420]
    %130 = vst [vmem:[%s115] ss:$2 sm:$0xff] %v101
    %v131 = vld.sshfl [vmem:[#allocation1 + $0x10] sm:$0xff pattern:$0x75316420]
    %v132 = vld.sshfl [vmem:[#allocation1 + $0x18] sm:$0xff pattern:$0x75316420]
    %133 = vst [vmem:[%s119] ss:$2 sm:$0xff] %v102
    %v134 = vld.sshfl [vmem:[#allocation1 + $0x20] sm:$0xff pattern:$0x75316420]
    %v135 = vld.sshfl [vmem:[#allocation1 + $0x28] sm:$0xff pattern:$0x75316420]
    %136 = vst [vmem:[%s123] ss:$2 sm:$0xff] %v103
    %v137 = vld.sshfl [vmem:[#allocation1 + $0x30] sm:$0xff pattern:$0x75316420]
    %v138 = vld.sshfl [vmem:[#allocation1 + $0x38] sm:$0xff pattern:$0x75316420]
    %vm155 = vcmask 1043456
    %v156 = vsel %vm155, %v113, 0.0
    %v157 = vsel %vm155, %v114, 0.0
    %v158 = vadd.f32 %v156, %v157
    %159 = vadd.xlane.f32.xlu0 %v158
    %v160 = vpop.xlane.xlu0 %159
    %v161 = vsel %vm155, %v117, 0.0
    %v162 = vsel %vm155, %v118, 0.0
    %v163 = vadd.f32 %v161, %v162
    %164 = vadd.xlane.f32.xlu0 %v163
    %v165 = vpop.xlane.xlu0 %164
    %v166 = vsel %vm155, %v121, 0.0
    %v167 = vsel %vm155, %v122, 0.0
    %v168 = vadd.f32 %v166, %v167
    %169 = vadd.xlane.f32.xlu0 %v168
    %v170 = vpop.xlane.xlu0 %169
    %v171 = vsel %vm155, %v125, 0.0
    %v172 = vsel %vm155, %v126, 0.0
    %v173 = vadd.f32 %v171, %v172
    %174 = vadd.xlane.f32.xlu0 %v173
    %v175 = vpop.xlane.xlu0 %174
    %v176 = vsel %vm155, %v128, 0.0
    %v177 = vsel %vm155, %v129, 0.0
    %v178 = vadd.f32 %v176, %v177
    %179 = vadd.xlane.f32.xlu0 %v178
    %v180 = vpop.xlane.xlu0 %179
    %v181 = vsel %vm155, %v131, 0.0
    %v182 = vsel %vm155, %v132, 0.0
    %v183 = vadd.f32 %v181, %v182
    %184 = vadd.xlane.f32.xlu0 %v183
    %v185 = vpop.xlane.xlu0 %184
    %v186 = vsel %vm155, %v134, 0.0
    %v187 = vsel %vm155, %v135, 0.0
    %v188 = vadd.f32 %v186, %v187
    %189 = vadd.xlane.f32.xlu0 %v188
    %v190 = vpop.xlane.xlu0 %189
    %v191 = vsel %vm155, %v137, 0.0
    %v192 = vsel %vm155, %v138, 0.0
    %v193 = vadd.f32 %v191, %v192
    %194 = vadd.xlane.f32.xlu0 %v193
    %v195 = vpop.xlane.xlu0 %194
    %v204 = vlaneseq
    %v205 = vand.u32 %v204, 127
    %v206 = vperm.slane %v160, %v205
    %v207 = vperm.slane %v165, %v205
    %v208 = vperm.slane %v170, %v205
    %v209 = vperm.slane %v175, %v205
    %v210 = vperm.slane %v180, %v205
    %v211 = vperm.slane %v185, %v205
    %v212 = vperm.slane %v190, %v205
    %v213 = vperm.slane %v195, %v205
    %vm214 = vcmask 1041409
    %v215 = vsel %vm214, %v207, %v206
    %vm216 = vcmask 1042434
    %v217 = vsel %vm216, %v208, %v215
    %vm218 = vcmask 1043459
    %v219 = vsel %vm218, %v209, %v217
    %vm220 = vcmask 1044484
    %v221 = vsel %vm220, %v210, %v219
    %vm222 = vcmask 1045509
    %v223 = vsel %vm222, %v211, %v221
    %vm224 = vcmask 1046534
    %v225 = vsel %vm224, %v212, %v223
    %vm226 = vcmask 1047559
    %v227 = vsel %vm226, %v213, %v225
    %v229 = vadd.f32 %v87, %v227
    %vm230 = vcmask 31744
    %231 = vst.msk [vmem:[#allocation2] sm:$0xff] %vm230, %v229
    // Predicated region
    $region42: #{tpu_custom_call.1} parent=1 // pred_check
      %p232 = pneg %p81
    $region43: #{tpu_custom_call.1} parent=1 // pred_check_branch
      %234 = sbr.rel (%p232) target = $region45
    $region44: #{tpu_custom_call.1} parent=1 // pred_region
      %v235 = vld [vmem:[#allocation2] sm:$0xff]
      %v236 = vpack.c.bf16 %v235, %v235
      %v237 = vld [vmem:[#allocation6] sm:$0xff]
      %v238 = vld [vmem:[#allocation8] sm:$0xf]
      %v240 = vperm.slane %v238, 0
      %v241 = vperm.slane %v238, 1
      %v242 = vperm.slane %v238, 2
      %v243 = vperm.slane %v238, 3
      %249 = vst [vmem:[#allocation1] ss:$4 sm:$0xff] %v237
      %v250 = vld.sshfl [vmem:[#allocation1] sm:$0xff pattern:$0x73625140]
      %v251 = vld.sshfl [vmem:[#allocation1 + $0x8] sm:$0xff pattern:$0x73625140]
      %v252 = vld.sshfl [vmem:[#allocation1 + $0x10] sm:$0xff pattern:$0x73625140]
      %v253 = vld.sshfl [vmem:[#allocation1 + $0x18] sm:$0xff pattern:$0x73625140]
      %v255 = vsel %vm230, %v236, 0
      %vm257 = vcmask 1041408
      %v258 = vsel %vm257, %v250, 0
      %v260 = vsel %vm257, %v251, 0
      %v262 = vsel %vm257, %v252, 0
      %v264 = vsel %vm257, %v253, 0
      %266 = vmatpush.bf16.msra.mxu0 0
      %267 = vmatpush.bf16.msra.mxu0 0
      %268 = vmatpush.bf16.msra.mxu0 0
      %269 = vmatpush.bf16.msra.mxu0 0
      %270 = vmatpush.bf16.msra.mxu0 0
      %271 = vmatpush.bf16.msra.mxu0 0
      %272 = vmatpush.bf16.msra.mxu0 0
      %273 = vmatpush.bf16.msra.mxu0 %v258
      %274 = vmatmul.bf16.gmra.mxu0 %v255
      %v275 = vpop.f32.mrf.mxu0
      %v276 = vadd.f32 %v240, %v275
      %v277 = vpop.f32.mrf.mxu0
      %278 = vdwg.mxu0
      %279 = vmatpush.bf16.msra.mxu0 0
      %280 = vmatpush.bf16.msra.mxu0 0
      %281 = vmatpush.bf16.msra.mxu0 0
      %282 = vmatpush.bf16.msra.mxu0 0
      %283 = vmatpush.bf16.msra.mxu0 0
      %284 = vmatpush.bf16.msra.mxu0 0
      %285 = vmatpush.bf16.msra.mxu0 0
      %286 = vmatpush.bf16.msra.mxu0 %v260
      %287 = vmatmul.bf16.gmra.mxu0 %v255
      %v288 = vpop.f32.mrf.mxu0
      %v289 = vadd.f32 %v241, %v288
      %v290 = vpop.f32.mrf.mxu0
      %291 = vdwg.mxu0
      %292 = vmatpush.bf16.msra.mxu0 0
      %293 = vmatpush.bf16.msra.mxu0 0
      %294 = vmatpush.bf16.msra.mxu0 0
      %295 = vmatpush.bf16.msra.mxu0 0
      %296 = vmatpush.bf16.msra.mxu0 0
      %297 = vmatpush.bf16.msra.mxu0 0
      %298 = vmatpush.bf16.msra.mxu0 0
      %299 = vmatpush.bf16.msra.mxu0 %v262
      %300 = vmatmul.bf16.gmra.mxu0 %v255
      %v301 = vpop.f32.mrf.mxu0
      %v302 = vadd.f32 %v242, %v301
      %v303 = vpop.f32.mrf.mxu0
      %304 = vdwg.mxu0
      %305 = vmatpush.bf16.msra.mxu0 0
      %306 = vmatpush.bf16.msra.mxu0 0
      %307 = vmatpush.bf16.msra.mxu0 0
      %308 = vmatpush.bf16.msra.mxu0 0
      %309 = vmatpush.bf16.msra.mxu0 0
      %310 = vmatpush.bf16.msra.mxu0 0
      %311 = vmatpush.bf16.msra.mxu0 0
      %312 = vmatpush.bf16.msra.mxu0 %v264
      %313 = vmatmul.bf16.gmra.mxu0 %v255
      %v314 = vpop.f32.mrf.mxu0
      %v315 = vadd.f32 %v243, %v314
      %v316 = vpop.f32.mrf.mxu0
      %317 = vdwg.mxu0
      %v318 = vmax.f32 %v276, 0.0
      %v319 = vmax.f32 %v289, 0.0
      %v320 = vmax.f32 %v302, 0.0
      %v321 = vmax.f32 %v315, 0.0
      %v322 = vpack.c.bf16 %v318, %v318
      %v323 = vpack.c.bf16 %v319, %v319
      %v324 = vpack.c.bf16 %v320, %v320
      %v325 = vpack.c.bf16 %v321, %v321
      %v326 = vld [vmem:[#allocation9] sm:$0xf]
      %v327 = vld [vmem:[#allocation9 + $0x4] sm:$0xf]
      %v328 = vld [vmem:[#allocation9 + $0x8] sm:$0xf]
      %v329 = vld [vmem:[#allocation9 + $0xc] sm:$0xf]
      %v330 = vld [vmem:[#allocation9 + $0x10] sm:$0xf]
      %v331 = vld [vmem:[#allocation9 + $0x14] sm:$0xf]
      %v332 = vld [vmem:[#allocation9 + $0x18] sm:$0xf]
      %v333 = vld [vmem:[#allocation9 + $0x1c] sm:$0xf]
      %v334 = vld [vmem:[#allocation9 + $0x20] sm:$0xf]
      %v335 = vld [vmem:[#allocation9 + $0x24] sm:$0xf]
      %v336 = vld [vmem:[#allocation9 + $0x28] sm:$0xf]
      %v337 = vld [vmem:[#allocation9 + $0x2c] sm:$0xf]
      %v338 = vld [vmem:[#allocation9 + $0x30] sm:$0xf]
      %v339 = vld [vmem:[#allocation9 + $0x34] sm:$0xf]
      %v340 = vld [vmem:[#allocation9 + $0x38] sm:$0xf]
      %v341 = vld [vmem:[#allocation9 + $0x3c] sm:$0xf]
      %v342 = vld [vmem:[#allocation9 + $0x40] sm:$0xf]
      %v343 = vld [vmem:[#allocation9 + $0x44] sm:$0xf]
      %v344 = vld [vmem:[#allocation9 + $0x48] sm:$0xf]
      %v345 = vld [vmem:[#allocation9 + $0x4c] sm:$0xf]
      %v346 = vld [vmem:[#allocation9 + $0x50] sm:$0xf]
      %v347 = vld [vmem:[#allocation9 + $0x54] sm:$0xf]
      %v348 = vld [vmem:[#allocation9 + $0x58] sm:$0xf]
      %v349 = vld [vmem:[#allocation9 + $0x5c] sm:$0xf]
      %v350 = vld [vmem:[#allocation9 + $0x60] sm:$0xf]
      %v351 = vld [vmem:[#allocation9 + $0x64] sm:$0xf]
      %v352 = vld [vmem:[#allocation9 + $0x68] sm:$0xf]
      %v353 = vld [vmem:[#allocation9 + $0x6c] sm:$0xf]
      %v354 = vld [vmem:[#allocation9 + $0x70] sm:$0xf]
      %v355 = vld [vmem:[#allocation9 + $0x74] sm:$0xf]
      %v356 = vld [vmem:[#allocation9 + $0x78] sm:$0xf]
      %v357 = vld [vmem:[#allocation9 + $0x7c] sm:$0xf]
      %v358 = vld [vmem:[#allocation9 + $0x80] sm:$0xf]
      %v359 = vld [vmem:[#allocation9 + $0x84] sm:$0xf]
      %v360 = vld [vmem:[#allocation9 + $0x88] sm:$0xf]
      %v361 = vld [vmem:[#allocation9 + $0x8c] sm:$0xf]
      %v362 = vld [vmem:[#allocation9 + $0x90] sm:$0xf]
      %v363 = vld [vmem:[#allocation9 + $0x94] sm:$0xf]
      %v364 = vld [vmem:[#allocation9 + $0x98] sm:$0xf]
      %v365 = vld [vmem:[#allocation9 + $0x9c] sm:$0xf]
      %v366 = vld [vmem:[#allocation9 + $0xa0] sm:$0xf]
      %v367 = vld [vmem:[#allocation9 + $0xa4] sm:$0xf]
      %v368 = vld [vmem:[#allocation9 + $0xa8] sm:$0xf]
      %v369 = vld [vmem:[#allocation9 + $0xac] sm:$0xf]
      %v370 = vld [vmem:[#allocation9 + $0xb0] sm:$0xf]
      %v371 = vld [vmem:[#allocation9 + $0xb4] sm:$0xf]
      %v372 = vld [vmem:[#allocation9 + $0xb8] sm:$0xf]
      %v373 = vld [vmem:[#allocation9 + $0xbc] sm:$0xf]
      %v374 = vld [vmem:[#allocation9 + $0xc0] sm:$0xf]
      %v375 = vld [vmem:[#allocation9 + $0xc4] sm:$0xf]
      %v376 = vld [vmem:[#allocation9 + $0xc8] sm:$0xf]
      %v377 = vld [vmem:[#allocation9 + $0xcc] sm:$0xf]
      %v378 = vld [vmem:[#allocation9 + $0xd0] sm:$0xf]
      %v379 = vld [vmem:[#allocation9 + $0xd4] sm:$0xf]
      %v380 = vld [vmem:[#allocation9 + $0xd8] sm:$0xf]
      %v381 = vld [vmem:[#allocation9 + $0xdc] sm:$0xf]
      %v382 = vld [vmem:[#allocation9 + $0xe0] sm:$0xf]
      %v383 = vld [vmem:[#allocation9 + $0xe4] sm:$0xf]
      %v384 = vld [vmem:[#allocation9 + $0xe8] sm:$0xf]
      %v385 = vld [vmem:[#allocation9 + $0xec] sm:$0xf]
      %v386 = vld [vmem:[#allocation9 + $0xf0] sm:$0xf]
      %v387 = vld [vmem:[#allocation9 + $0xf4] sm:$0xf]
      %v388 = vld [vmem:[#allocation9 + $0xf8] sm:$0xf]
      %v389 = vld [vmem:[#allocation9 + $0xfc] sm:$0xf]
      %v390 = vld [vmem:[%s4] sm:$0x1]
      %v392 = vperm.slane %v390, 0
      %v458 = vunpack.c.l.b16 %v326
      %v459 = vunpack.c.l.b16 %v327
      %v460 = vunpack.c.l.b16 %v328
      %v461 = vunpack.c.l.b16 %v329
      %v462 = vunpack.c.l.b16 %v330
      %v463 = vunpack.c.l.b16 %v331
      %v464 = vunpack.c.l.b16 %v332
      %v465 = vunpack.c.l.b16 %v333
      %v466 = vunpack.c.l.b16 %v334
      %v467 = vunpack.c.l.b16 %v335
      %v468 = vunpack.c.l.b16 %v336
      %v469 = vunpack.c.l.b16 %v337
      %v470 = vunpack.c.l.b16 %v338
      %v471 = vunpack.c.l.b16 %v339
      %v472 = vunpack.c.l.b16 %v340
      %v473 = vunpack.c.l.b16 %v341
      %v474 = vunpack.c.l.b16 %v342
      %v475 = vunpack.c.l.b16 %v343
      %v476 = vunpack.c.l.b16 %v344
      %v477 = vunpack.c.l.b16 %v345
      %v478 = vunpack.c.l.b16 %v346
      %v479 = vunpack.c.l.b16 %v347
      %v480 = vunpack.c.l.b16 %v348
      %v481 = vunpack.c.l.b16 %v349
      %v482 = vunpack.c.l.b16 %v350
      %v483 = vunpack.c.l.b16 %v351
      %v484 = vunpack.c.l.b16 %v352
      %v485 = vunpack.c.l.b16 %v353
      %v486 = vunpack.c.l.b16 %v354
      %v487 = vunpack.c.l.b16 %v355
      %v488 = vunpack.c.l.b16 %v356
      %v489 = vunpack.c.l.b16 %v357
      %v490 = vunpack.c.l.b16 %v358
      %v491 = vunpack.c.l.b16 %v359
      %v492 = vunpack.c.l.b16 %v360
      %v493 = vunpack.c.l.b16 %v361
      %v494 = vunpack.c.l.b16 %v362
      %v495 = vunpack.c.l.b16 %v363
      %v496 = vunpack.c.l.b16 %v364
      %v497 = vunpack.c.l.b16 %v365
      %v498 = vunpack.c.l.b16 %v366
      %v499 = vunpack.c.l.b16 %v367
      %v500 = vunpack.c.l.b16 %v368
      %v501 = vunpack.c.l.b16 %v369
      %v502 = vunpack.c.l.b16 %v370
      %v503 = vunpack.c.l.b16 %v371
      %v504 = vunpack.c.l.b16 %v372
      %v505 = vunpack.c.l.b16 %v373
      %v506 = vunpack.c.l.b16 %v374
      %v507 = vunpack.c.l.b16 %v375
      %v508 = vunpack.c.l.b16 %v376
      %v509 = vunpack.c.l.b16 %v377
      %v510 = vunpack.c.l.b16 %v378
      %v511 = vunpack.c.l.b16 %v379
      %v512 = vunpack.c.l.b16 %v380
      %v513 = vunpack.c.l.b16 %v381
      %v514 = vunpack.c.l.b16 %v382
      %v515 = vunpack.c.l.b16 %v383
      %v516 = vunpack.c.l.b16 %v384
      %v517 = vunpack.c.l.b16 %v385
      %v518 = vunpack.c.l.b16 %v386
      %v519 = vunpack.c.l.b16 %v387
      %v520 = vunpack.c.l.b16 %v388
      %v521 = vunpack.c.l.b16 %v389
      %v522 = vpack.c.b16 %v459, %v458
      %v523 = vpack.c.b16 %v461, %v460
      %v524 = vpack.c.b16 %v463, %v462
      %v525 = vpack.c.b16 %v465, %v464
      %v526 = vpack.c.b16 %v467, %v466
      %v527 = vpack.c.b16 %v469, %v468
      %v528 = vpack.c.b16 %v471, %v470
      %v529 = vpack.c.b16 %v473, %v472
      %v530 = vpack.c.b16 %v475, %v474
      %v531 = vpack.c.b16 %v477, %v476
      %v532 = vpack.c.b16 %v479, %v478
      %v533 = vpack.c.b16 %v481, %v480
      %v534 = vpack.c.b16 %v483, %v482
      %v535 = vpack.c.b16 %v485, %v484
      %v536 = vpack.c.b16 %v487, %v486
      %v537 = vpack.c.b16 %v489, %v488
      %v538 = vpack.c.b16 %v491, %v490
      %v539 = vpack.c.b16 %v493, %v492
      %v540 = vpack.c.b16 %v495, %v494
      %v541 = vpack.c.b16 %v497, %v496
      %v542 = vpack.c.b16 %v499, %v498
      %v543 = vpack.c.b16 %v501, %v500
      %v544 = vpack.c.b16 %v503, %v502
      %v545 = vpack.c.b16 %v505, %v504
      %v546 = vpack.c.b16 %v507, %v506
      %v547 = vpack.c.b16 %v509, %v508
      %v548 = vpack.c.b16 %v511, %v510
      %v549 = vpack.c.b16 %v513, %v512
      %v550 = vpack.c.b16 %v515, %v514
      %v551 = vpack.c.b16 %v517, %v516
      %v552 = vpack.c.b16 %v519, %v518
      %v553 = vpack.c.b16 %v521, %v520
      %586 = vmatpush.bf16.msra.mxu0 %v529
      %587 = vmatpush.bf16.msra.mxu0 %v528
      %588 = vmatpush.bf16.msra.mxu0 %v527
      %589 = vmatpush.bf16.msra.mxu0 %v526
      %590 = vmatpush.bf16.msra.mxu0 %v525
      %591 = vmatpush.bf16.msra.mxu0 %v524
      %592 = vmatpush.bf16.msra.mxu0 %v523
      %593 = vmatpush.bf16.msra.mxu0 %v522
      %594 = vmatmul.bf16.gmra.mxu0 %v322
      %v595 = vpop.f32.mrf.mxu0
      %v596 = vadd.f32 %v392, %v595
      %v597 = vpop.f32.mrf.mxu0
      %598 = vdwg.mxu0
      %599 = vmatpush.bf16.msra.mxu0 %v537
      %600 = vmatpush.bf16.msra.mxu0 %v536
      %601 = vmatpush.bf16.msra.mxu0 %v535
      %602 = vmatpush.bf16.msra.mxu0 %v534
      %603 = vmatpush.bf16.msra.mxu0 %v533
      %604 = vmatpush.bf16.msra.mxu0 %v532
      %605 = vmatpush.bf16.msra.mxu0 %v531
      %606 = vmatpush.bf16.msra.mxu0 %v530
      %607 = vmatmul.bf16.gmra.mxu0 %v323
      %v608 = vpop.f32.mrf.mxu0
      %v609 = vadd.f32 %v596, %v608
      %v610 = vpop.f32.mrf.mxu0
      %611 = vdwg.mxu0
      %612 = vmatpush.bf16.msra.mxu0 %v545
      %613 = vmatpush.bf16.msra.mxu0 %v544
      %614 = vmatpush.bf16.msra.mxu0 %v543
      %615 = vmatpush.bf16.msra.mxu0 %v542
      %616 = vmatpush.bf16.msra.mxu0 %v541
      %617 = vmatpush.bf16.msra.mxu0 %v540
      %618 = vmatpush.bf16.msra.mxu0 %v539
      %619 = vmatpush.bf16.msra.mxu0 %v538
      %620 = vmatmul.bf16.gmra.mxu0 %v324
      %v621 = vpop.f32.mrf.mxu0
      %v622 = vadd.f32 %v609, %v621
      %v623 = vpop.f32.mrf.mxu0
      %624 = vdwg.mxu0
      %625 = vmatpush.bf16.msra.mxu0 %v553
      %626 = vmatpush.bf16.msra.mxu0 %v552
      %627 = vmatpush.bf16.msra.mxu0 %v551
      %628 = vmatpush.bf16.msra.mxu0 %v550
      %629 = vmatpush.bf16.msra.mxu0 %v549
      %630 = vmatpush.bf16.msra.mxu0 %v548
      %631 = vmatpush.bf16.msra.mxu0 %v547
      %632 = vmatpush.bf16.msra.mxu0 %v546
      %633 = vmatmul.bf16.gmra.mxu0 %v325
      %v634 = vpop.f32.mrf.mxu0
      %v635 = vadd.f32 %v622, %v634
      %v636 = vpop.f32.mrf.mxu0
      %637 = vdwg.mxu0
      %638 = vst [vmem:[#allocation11] sm:$0xff] %v635
    $region45: #{tpu_custom_call.1} parent=1 // pred_fallthru
      _
    // Predicated region
    $region46: #{tpu_custom_call.1} parent=1 // pred_check
      _
    $region47: #{tpu_custom_call.1} parent=1 // pred_check_branch
      %640 = sbr.rel (0) target = $region49
    $region48: #{tpu_custom_call.1} parent=1 // pred_region
      %642 = vsyncadd [#allocation5], 0
      %s644 = sshll.u32 [#allocation11], 4
      %s645 = int_to_ptr.vmem [resolvable:$true] %s644
      %s646 = sshll.u32 %s5, 4
      %s647 = int_to_ptr.hbm [resolvable:$true] %s646
      %649 = dma.vmem_to_hbm [thread:$0]  %s645, 128, %s647, [#allocation5]
    $region49: #{tpu_custom_call.1} parent=1 // pred_fallthru
      _
    // Predicated region
    $region50: #{tpu_custom_call.1} parent=1 // pred_check
      _
    $region51: #{tpu_custom_call.1} parent=1 // pred_check_branch
      %651 = sbr.rel (0) target = $region53
    $region52: #{tpu_custom_call.1} parent=1 // pred_region
      %653 = dma.done [#allocation5], 128
    $region53: #{tpu_custom_call.1} parent=1 // pred_fallthru
      _
    %654 = vsyncpa [#allocation4], 1
    %655 = vsyncpa [#allocation7], 1
    %656 = vsyncpa [#allocation10], 1
    %657 = vsyncpa [#allocation5], 1

</llo_original>
